<compile_context>
chip_gen: v6e
topology: v6e:2x2x1
jax: 0.10.0
libtpu: 0.0.40
codegen_flags: <defaults>
</compile_context>

<pallas_src>
import jax
import jax.numpy as jnp
from jax.experimental import pallas as pl
from jax.experimental.pallas import tpu as pltpu

WINDOW = 5
EMB_DIM = 16
FILTERS = 128
EPS = 1e-5                 # BatchNorm1d default eps
NUM_STAT_SHARDS = 2        # per-TensorCore partial stats (v7x megacore); fine on 1-TC chips


def _ceil_to(x, m):
    return (x + m - 1) // m * m


def conv_stats_kernel(x_ref, wc_ref, sum_ref, ssq_ref):
    """Phase 1: stats only.  h = relu(x @ wc) (conv bias folded into wc) never touches HBM."""
    @pl.when(pl.program_id(1) == 0)
    def _():
        sum_ref[...] = jnp.zeros_like(sum_ref)
        ssq_ref[...] = jnp.zeros_like(ssq_ref)

    # bf16 x bf16 -> f32 accumulate on the MXU.
    h = jnp.dot(x_ref[...], wc_ref[...], preferred_element_type=jnp.float32)
    h = jnp.maximum(h, 0.0)
    # One-pass BN statistics in f32 (var = E[h^2] - E[h]^2 computed in the wrapper).
    sum_ref[...] += jnp.sum(h, axis=0, keepdims=True)[None]
    ssq_ref[...] += jnp.sum(h * h, axis=0, keepdims=True)[None]


def project_kernel(x_ref, wc_ref, scale_ref, shift_ref, wo_ref, bo_ref, out_ref):
    """Phase 2: recompute h = relu(x @ wc); f32 BN normalize+affine; project to padded vocab."""
    h = jnp.dot(x_ref[...], wc_ref[...], preferred_element_type=jnp.float32)
    h = jnp.maximum(h, 0.0)
    hn = h * scale_ref[...] + shift_ref[...]           # f32 VPU; avoids double bf16 rounding
    out_ref[...] = (
        jnp.dot(hn.astype(jnp.bfloat16), wo_ref[...], preferred_element_type=jnp.float32)
        + bo_ref[...]
    ).astype(out_ref.dtype)


def convlm_forward(tokens, emb_table, conv_w, conv_b, bn_gamma, bn_beta, out_w, out_b):
    """tokens: (seq_len, batch) int32.  Returns (logits (seq_len, batch, vocab) f32, None)."""
    seq_len, batch = tokens.shape
    vocab = out_w.shape[0]
    M = seq_len * batch
    K = WINDOW * EMB_DIM                         # 80
    KP = _ceil_to(K + 1, 128)                    # +1 ones-column for the folded conv bias -> 128
    VP = _ceil_to(vocab, 128)                    # lane-dense output stores
    TM = min(512, _ceil_to(M, 16))               # 512-row streaming tiles; 16-aligned for bf16
    n_tiles = pl.cdiv(M, TM)
    tiles_per_shard = pl.cdiv(n_tiles, NUM_STAT_SHARDS)
    M_pad = NUM_STAT_SHARDS * tiles_per_shard * TM

    # --- JAX glue: left-pad with token id 0 (as in the PyTorch reference), embed, im2col ---
    # Built directly in bf16 via concatenate/pad (no materialized f32 intermediate, no scatter).
    # TODO(synk): for large M the 5x im2col HBM inflation could be removed entirely by passing
    # the raw (L+W-1, N, C) bf16 embeddings and forming the 5 taps with shifted slices /
    # sub-matmuls inside the kernel (~8x fewer phase-1 input bytes).
    padding = jnp.zeros((WINDOW - 1, batch), dtype=tokens.dtype)
    padded = jnp.concatenate([padding, tokens], axis=0)                         # (L+W-1, N)
    embs = emb_table[padded].astype(jnp.bfloat16)                               # (L+W-1, N, C)
    windows = jnp.stack([embs[k:k + seq_len] for k in range(WINDOW)], axis=2)   # (L, N, W, C)
    x = jnp.concatenate(
        [windows.reshape(M, K), jnp.ones((M, 1), jnp.bfloat16)], axis=1)        # (M, K+1)
    # Pad rows M..M_pad are all-zero (including the ones column) -> contribute 0 to BN stats.
    x = jnp.pad(x, ((0, M_pad - M), (0, KP - (K + 1))))                         # (M_pad, KP)

    # Conv weight (F, C, W) -> (W, C, F) -> (K, F); append conv bias as row K; zero-pad to KP.
    wc = jnp.concatenate(
        [jnp.transpose(conv_w, (2, 1, 0)).reshape(K, FILTERS), conv_b[None, :]], axis=0)
    wc = jnp.pad(wc, ((0, KP - (K + 1)), (0, 0))).astype(jnp.bfloat16)          # (KP, F)

    # --- phase 1: conv-as-matmul + ReLU -> global BN statistics (stats only, no h writeback) ---
    s2, ssq2 = pl.pallas_call(
        conv_stats_kernel,
        grid=(NUM_STAT_SHARDS, tiles_per_shard),
        in_specs=[
            pl.BlockSpec((TM, KP), lambda c, i: (c * tiles_per_shard + i, 0)),
            pl.BlockSpec((KP, FILTERS), lambda c, i: (0, 0)),     # resident conv weights
        ],
        out_specs=(
            pl.BlockSpec((1, 1, FILTERS), lambda c, i: (c, 0, 0)),  # per-shard resident accum
            pl.BlockSpec((1, 1, FILTERS), lambda c, i: (c, 0, 0)),
        ),
        out_shape=(
            jax.ShapeDtypeStruct((NUM_STAT_SHARDS, 1, FILTERS), jnp.float32),
            jax.ShapeDtypeStruct((NUM_STAT_SHARDS, 1, FILTERS), jnp.float32),
        ),
        compiler_params=pltpu.CompilerParams(
            dimension_semantics=("parallel", "arbitrary")),
    )(x, wc)

    # --- tiny f32 glue: combine per-core partials; global (biased) BN stats; BN scale/shift ---
    s = jnp.sum(s2, axis=0)                              # (1, F)
    ssq = jnp.sum(ssq2, axis=0)                          # (1, F)
    mean = s / M                                         # divide by the real row count
    var = jnp.maximum(ssq / M - mean * mean, 0.0)        # biased variance (PyTorch train-mode)
    inv_std = jax.lax.rsqrt(var + EPS)
    scale = (bn_gamma[None, :] * inv_std).astype(jnp.float32)        # (1, F)
    shift = (bn_beta[None, :] - mean * scale).astype(jnp.float32)    # (1, F)

    wo = jnp.pad(out_w.T, ((0, 0), (0, VP - vocab))).astype(jnp.bfloat16)        # (F, VP)
    bo = jnp.pad(out_b, (0, VP - vocab)).reshape(1, VP).astype(jnp.float32)      # (1, VP)

    # --- phase 2: recompute h, normalize in f32, project; M axis independent -> parallel ---
    logits_pad = pl.pallas_call(
        project_kernel,
        grid=(M_pad // TM,),
        in_specs=[
            pl.BlockSpec((TM, KP), lambda i: (i, 0)),
            pl.BlockSpec((KP, FILTERS), lambda i: (0, 0)),        # resident conv weights
            pl.BlockSpec((1, FILTERS), lambda i: (0, 0)),         # resident BN scale
            pl.BlockSpec((1, FILTERS), lambda i: (0, 0)),         # resident BN shift
            pl.BlockSpec((FILTERS, VP), lambda i: (0, 0)),        # resident output weights
            pl.BlockSpec((1, VP), lambda i: (0, 0)),              # resident output bias
        ],
        out_specs=pl.BlockSpec((TM, VP), lambda i: (i, 0)),
        out_shape=jax.ShapeDtypeStruct((M_pad, VP), jnp.bfloat16),  # halve the dominant write
        compiler_params=pltpu.CompilerParams(dimension_semantics=("parallel",)),
    )(x, wc, scale, shift, wo, bo)

    logits = logits_pad[:M, :vocab].astype(jnp.float32).reshape(seq_len, batch, vocab)
    return logits, None


def _reference_forward(tokens, emb_table, conv_w, conv_b, bn_gamma, bn_beta, out_w, out_b):
    """Pure-JAX f32 reference matching the PyTorch forward (BatchNorm in training mode)."""
    seq_len, batch = tokens.shape
    padding = jnp.zeros((WINDOW - 1, batch), dtype=tokens.dtype)
    padded = jnp.concatenate([padding, tokens], axis=0)
    embs = emb_table[padded]                          # (L+W-1, N, C)
    x_ncl = jnp.transpose(embs, (1, 2, 0))            # NCL
    conv = jax.lax.conv_general_dilated(
        x_ncl, conv_w, window_strides=(1,), padding="VALID",
        dimension_numbers=("NCH", "OIH", "NCH"))
    conv = conv + conv_b[None, :, None]
    conv = jnp.maximum(conv, 0.0)
    mean = conv.mean(axis=(0, 2), keepdims=True)
    var = ((conv - mean) ** 2).mean(axis=(0, 2), keepdims=True)
    bn = (conv - mean) * jax.lax.rsqrt(var + EPS)
    bn = bn * bn_gamma[None, :, None] + bn_beta[None, :, None]
    return jnp.einsum("nfl,vf->lnv", bn, out_w) + out_b


if __name__ == "__main__":
    vocab_size = 64
    seq_len, batch = 8, 2

    key = jax.random.PRNGKey(0)
    k1, k2, k3, k4, k5, k6, k7, k8 = jax.random.split(key, 8)

    emb_table = 0.1 * jax.random.normal(k1, (vocab_size, EMB_DIM), jnp.float32)
    emb_table = emb_table.at[1].set(0.0)  # padding_idx=1
    conv_w = 0.1 * jax.random.normal(k2, (FILTERS, EMB_DIM, WINDOW), jnp.float32)
    conv_b = 0.1 * jax.random.normal(k3, (FILTERS,), jnp.float32)
    bn_gamma = 1.0 + 0.1 * jax.random.normal(k4, (FILTERS,), jnp.float32)
    bn_beta = 0.1 * jax.random.normal(k5, (FILTERS,), jnp.float32)
    out_w = 0.1 * jax.random.normal(k6, (vocab_size, FILTERS), jnp.float32)
    out_b = 0.1 * jax.random.normal(k7, (vocab_size,), jnp.float32)

    tokens = jax.random.randint(k8, (seq_len, batch), 0, vocab_size, dtype=jnp.int32)

    logits, hidden = convlm_forward(
        tokens, emb_table, conv_w, conv_b, bn_gamma, bn_beta, out_w, out_b)
    logits = jax.block_until_ready(logits)
    assert logits.shape == (seq_len, batch, vocab_size)
    assert hidden is None

    ref = _reference_forward(
        tokens, emb_table, conv_w, conv_b, bn_gamma, bn_beta, out_w, out_b)
    assert jnp.allclose(logits, ref, atol=5e-2, rtol=5e-2), "mismatch vs JAX reference"

    print("KERNEL_OK")
</pallas_src>

<mosaic_0001>
module attributes {stable_mosaic.version = 11 : i64} {
  func.func @conv_stats_kernel(%arg0: i32, %arg1: i32, %arg2: memref<16x128xbf16, #tpu.memory_space<vmem>>, %arg3: memref<128x128xbf16, #tpu.memory_space<vmem>>, %arg4: memref<1x1x128xf32, #tpu.memory_space<vmem>>, %arg5: memref<1x1x128xf32, #tpu.memory_space<vmem>>) attributes {dimension_semantics = [#tpu.dimension_semantics<parallel>, #tpu.dimension_semantics<arbitrary>], iteration_bounds = array<i64: 2, 1>, scalar_prefetch = 0 : i64, scratch_operands = 0 : i64, tpu.core_type = #tpu.core_type<tc>, window_params = [{transform_indices = @transform_0, window_bounds = array<i64: 16, 128>}, {pipeline_mode = #tpu.pipeline_mode<synchronous>, transform_indices = @transform_1, window_bounds = array<i64: 128, 128>}, {transform_indices = @transform_2, window_bounds = array<i64: 1, 1, 128>}, {transform_indices = @transform_3, window_bounds = array<i64: 1, 1, 128>}]} {
    %c0_i32 = arith.constant 0 : i32
    %0 = arith.cmpi eq, %arg1, %c0_i32 : i32
    %1 = arith.extui %0 : i1 to i32
    %c0_i32_0 = arith.constant 0 : i32
    %2 = arith.cmpi ne, %1, %c0_i32_0 : i32
    scf.if %2 {
      %cst_19 = arith.constant 0.000000e+00 : f32
      %21 = vector.broadcast %cst_19 : f32 to vector<1x1x128xf32>
      %c0_20 = arith.constant 0 : index
      %c0_21 = arith.constant 0 : index
      %c0_22 = arith.constant 0 : index
      %22 = vector.load %arg4[%c0_20, %c0_21, %c0_22] : memref<1x1x128xf32, #tpu.memory_space<vmem>>, vector<1x1x128xf32>
      tpu.vector_store %arg4[%c0_20, %c0_21, %c0_22], %21 {strides = array<i32>} : memref<1x1x128xf32, #tpu.memory_space<vmem>>, vector<1x1x128xf32>,
      %cst_23 = arith.constant 0.000000e+00 : f32
      %23 = vector.broadcast %cst_23 : f32 to vector<1x1x128xf32>
      %c0_24 = arith.constant 0 : index
      %c0_25 = arith.constant 0 : index
      %c0_26 = arith.constant 0 : index
      %24 = vector.load %arg5[%c0_24, %c0_25, %c0_26] : memref<1x1x128xf32, #tpu.memory_space<vmem>>, vector<1x1x128xf32>
      tpu.vector_store %arg5[%c0_24, %c0_25, %c0_26], %23 {strides = array<i32>} : memref<1x1x128xf32, #tpu.memory_space<vmem>>, vector<1x1x128xf32>,
    } else {
    }
    %c0 = arith.constant 0 : index
    %c0_1 = arith.constant 0 : index
    %3 = vector.load %arg2[%c0, %c0_1] : memref<16x128xbf16, #tpu.memory_space<vmem>>, vector<16x128xbf16>
    %c0_2 = arith.constant 0 : index
    %c0_3 = arith.constant 0 : index
    %4 = vector.load %arg3[%c0_2, %c0_3] : memref<128x128xbf16, #tpu.memory_space<vmem>>, vector<128x128xbf16>
    %cst = arith.constant dense<0.000000e+00> : vector<16x128xf32>
    %5 = tpu.matmul %3, %4, %cst {dimension_numbers = #tpu.dot_dimension_numbers<[1], [0], [0], [1], [0, 0, 1, 1], [], []>} : vector<16x128xbf16>, vector<128x128xbf16>, vector<16x128xf32> -> vector<16x128xf32>
    %cst_4 = arith.constant 0.000000e+00 : f32
    %6 = vector.broadcast %cst_4 : f32 to vector<16x128xf32>
    %7 = arith.maximumf %5, %6 : vector<16x128xf32>
    %c0_5 = arith.constant 0 : index
    %c0_6 = arith.constant 0 : index
    %c0_7 = arith.constant 0 : index
    %8 = vector.load %arg4[%c0_5, %c0_6, %c0_7] : memref<1x1x128xf32, #tpu.memory_space<vmem>>, vector<1x1x128xf32>
    %cst_8 = arith.constant dense<0.000000e+00> : vector<128xf32>
    %9 = vector.multi_reduction <add>, %7, %cst_8 [0] : vector<16x128xf32> to vector<128xf32>
    %10 = vector.shape_cast %9 : vector<128xf32> to vector<1x128xf32>
    %11 = vector.shape_cast %10 : vector<1x128xf32> to vector<1x1x128xf32>
    %12 = arith.addf %8, %11 : vector<1x1x128xf32>
    %c0_9 = arith.constant 0 : index
    %c0_10 = arith.constant 0 : index
    %c0_11 = arith.constant 0 : index
    %13 = vector.load %arg4[%c0_9, %c0_10, %c0_11] : memref<1x1x128xf32, #tpu.memory_space<vmem>>, vector<1x1x128xf32>
    tpu.vector_store %arg4[%c0_9, %c0_10, %c0_11], %12 {strides = array<i32>} : memref<1x1x128xf32, #tpu.memory_space<vmem>>, vector<1x1x128xf32>,
    %c0_12 = arith.constant 0 : index
    %c0_13 = arith.constant 0 : index
    %c0_14 = arith.constant 0 : index
    %14 = vector.load %arg5[%c0_12, %c0_13, %c0_14] : memref<1x1x128xf32, #tpu.memory_space<vmem>>, vector<1x1x128xf32>
    %15 = arith.mulf %7, %7 : vector<16x128xf32>
    %cst_15 = arith.constant dense<0.000000e+00> : vector<128xf32>
    %16 = vector.multi_reduction <add>, %15, %cst_15 [0] : vector<16x128xf32> to vector<128xf32>
    %17 = vector.shape_cast %16 : vector<128xf32> to vector<1x128xf32>
    %18 = vector.shape_cast %17 : vector<1x128xf32> to vector<1x1x128xf32>
    %19 = arith.addf %14, %18 : vector<1x1x128xf32>
    %c0_16 = arith.constant 0 : index
    %c0_17 = arith.constant 0 : index
    %c0_18 = arith.constant 0 : index
    %20 = vector.load %arg5[%c0_16, %c0_17, %c0_18] : memref<1x1x128xf32, #tpu.memory_space<vmem>>, vector<1x1x128xf32>
    tpu.vector_store %arg5[%c0_16, %c0_17, %c0_18], %19 {strides = array<i32>} : memref<1x1x128xf32, #tpu.memory_space<vmem>>, vector<1x1x128xf32>,
    return
  }
  func.func @transform_0(%arg0: i32, %arg1: i32) -> (i32, i32) {
    %c1_i32 = arith.constant 1 : i32
    %0 = arith.muli %arg0, %c1_i32 : i32
    %1 = arith.addi %0, %arg1 : i32
    %c0_i32 = arith.constant 0 : i32
    %c0_i32_0 = arith.constant 0 : i32
    return %1, %c0_i32 : i32, i32
  }
  func.func @transform_1(%arg0: i32, %arg1: i32) -> (i32, i32) {
    %c0_i32 = arith.constant 0 : i32
    %c0_i32_0 = arith.constant 0 : i32
    %c0_i32_1 = arith.constant 0 : i32
    return %c0_i32, %c0_i32_0 : i32, i32
  }
  func.func @transform_2(%arg0: i32, %arg1: i32) -> (i32, i32, i32) {
    %c0_i32 = arith.constant 0 : i32
    %c0_i32_0 = arith.constant 0 : i32
    %c0_i32_1 = arith.constant 0 : i32
    return %arg0, %c0_i32, %c0_i32_0 : i32, i32, i32
  }
  func.func @transform_3(%arg0: i32, %arg1: i32) -> (i32, i32, i32) {
    %c0_i32 = arith.constant 0 : i32
    %c0_i32_0 = arith.constant 0 : i32
    %c0_i32_1 = arith.constant 0 : i32
    return %arg0, %c0_i32, %c0_i32_0 : i32, i32, i32
  }
}

</mosaic_0001>

<llo_original>
// kernel: tpu_custom_call.1
$region0: #{tpu_custom_call.1}
  #allocation0 [shape = 'u32[]', space=smem, size = 0x4, offset = 0x4, fixed_abs, tag = 'smem constant byte address 0x4 - core index']
  #allocation1 [shape = 'u32[144,128]{1,0:T(1,128)}', space=vmem, size = 0x12000, scoped, tag = 'internal scratch']
  %s0 = inlined_call_operand.hbm [shape: bf16[32,128], index: 0, kind: input, shape index: {}]
  %s1 = inlined_call_operand.hbm [shape: bf16[128,128], index: 1, kind: input, shape index: {}]
  %s2 = inlined_call_operand.hbm [shape: f32[2,1,128], index: 2, kind: output, shape index: {0}]
  %s3 = inlined_call_operand.hbm [shape: f32[2,1,128], index: 3, kind: output, shape index: {1}]
  %4 = xla_tuple %s2, %s3
  %s5 = sld [smem:[#allocation0]]
  $region61: #{tpu_custom_call.1} parent=0
    _
  %s7 = ssub.s32 1, %s5
  %s8 = scalar_select 0, %s7, %s5
  $region1: #{tpu_custom_call.1} parent=0
    #allocation2 [shape = 'u8[8192]{0}', space=vmem, size = 0x2000, scoped, tag = 'input window, operand 0']
    #allocation3 [shape = 's32[2]{0}', space=sflag, size = 0x8, scoped, tag = 'scoped memory for tpu_custom_call.1']
    #allocation4 [shape = 's32[2]{0}', space=sflag, size = 0x8, scoped, tag = 'scoped memory for tpu_custom_call.1']
    #allocation5 [shape = 'u8[32768]{0}', space=vmem, size = 0x8000, scoped, tag = 'input window, operand 1, single buffered']
    #allocation6 [shape = 's32[1]{0}', space=sflag, size = 0x4, scoped, tag = 'scoped memory for tpu_custom_call.1']
    #allocation7 [shape = 'u8[1024]{0}', space=vmem, size = 0x400, scoped, tag = 'output window, operand 0']
    #allocation8 [shape = 'u8[1024]{0}', space=vmem, size = 0x400, scoped, tag = 'output window, operand 1']
    #allocation9 [shape = 's32[2]{0}', space=sflag, size = 0x8, scoped, tag = 'scoped memory for tpu_custom_call.1']
    %9 = vsyncpa [#allocation3], 0
    %s10 = scalar_lea.sflag [#allocation3], 1
    %11 = vsyncpa %s10, 0
    %12 = vsyncpa [#allocation6], 0
    %13 = vsyncpa [#allocation4], 0
    %s14 = scalar_lea.sflag [#allocation4], 1
    %15 = vsyncpa %s14, 0
    %16 = vsyncpa [#allocation9], 0
    %s17 = scalar_lea.sflag [#allocation9], 1
    %18 = vsyncpa %s17, 0
    loop: start=0, step=1, limit=4
    $region2: #{tpu_custom_call.1} parent=1 // loop_pre_header
      _
    $region3: #{tpu_custom_call.1} parent=1 // loop_header
      %s20 = sphi 0, %s24
      %p21 = scmp.ge.s32.totalorder %s20, 4
      %s27 = sphi 0, %s39
      %s28 = sphi 0, %s35
      %s29 = sphi 0, %s27
      %s30 = sphi 0, %s28
      %s31 = sphi 0, %s29
      %s32 = sphi 0, %s30
      %s44 = sphi 0, %s46
      %s47 = sphi 0, %s44
      %s48 = sphi 0, %s47
      %s64 = sphi 0, %s48
      %s68 = sphi 0, %s68
      %s70 = sphi 0, %s68
      %s71 = sphi 0, %s70
      %s85 = sphi 0, %s71
      %s91 = sphi 0, %s93
      %s94 = sphi 0, %s91
      %s95 = sphi 0, %s94
      %s111 = sphi 0, %s95
      %s117 = sphi 0, %s119
      %s120 = sphi 0, %s117
      %s121 = sphi 0, %s120
      %s137 = sphi 0, %s121
    $region4: #{tpu_custom_call.1} parent=1 // loop_header_branch
      %23 = sbr.rel (%p21) target = $region8
    $region5: #{tpu_custom_call.1} parent=1 // loop_body
      %s25 = ssub.s32 %s20, 1
      %s26 = ssub.s32 %s20, 2
      %s33 = sadd.s32 1, %s28
      %p34 = scmp.ge.s32.totalorder %s33, 1
      %s35 = scalar_select %p34, 0, %s33
      %s36 = sadd.s32 1, %s27
      %s37 = scalar_select %p34, %s36, %s27
      %p38 = scmp.ge.s32.totalorder %s37, 2
      %s39 = scalar_select %p38, 0, %s37
      %s40 = sadd.s32 %s27, %s28
      %s41 = sadd.s32 %s39, %s35
      %s42 = ssub.s32 %s40, %s41
      %p43 = scmp.eq.s32.totalorder %s42, 0
      %s45 = sadd.s32 %s44, 1
      %s46 = scalar_select %p43, %s44, %s45
      %p49 = pneg %p43
      %p50 = scmp.eq.s32.totalorder %s20, 1
      %p51 = por %p49, %p50
      %p52 = scmp.ne.s32.totalorder %s44, %s47
      %p53 = scmp.eq.s32.totalorder %s20, 0
      %p54 = por %p52, %p53
      %p55 = scmp.ne.s32.totalorder %s44, %s47
      %p56 = scmp.eq.s32.totalorder %s25, 1
      %p57 = por %p55, %p56
      %p58 = scmp.ne.s32.totalorder %s47, %s48
      %p59 = scmp.eq.s32.totalorder %s25, 0
      %p60 = por %p58, %p59
      %p61 = scmp.ne.s32.totalorder %s47, %s48
      %p62 = scmp.eq.s32.totalorder %s26, 1
      %p63 = por %p61, %p62
      %p65 = scmp.ne.s32.totalorder %s48, %s64
      %p66 = scmp.eq.s32.totalorder %s26, 0
      %p67 = por %p65, %p66
      %s69 = sadd.s32 %s68, 1
      %p72 = scmp.eq.s32.totalorder %s20, 1
      %p73 = scmp.ne.s32.totalorder %s68, %s70
      %p74 = scmp.eq.s32.totalorder %s20, 0
      %p75 = por %p73, %p74
      %p76 = scmp.ne.s32.totalorder %s68, %s70
      %p77 = scmp.eq.s32.totalorder %s25, 1
      %p78 = por %p76, %p77
      %p79 = scmp.ne.s32.totalorder %s70, %s71
      %p80 = scmp.eq.s32.totalorder %s25, 0
      %p81 = por %p79, %p80
      %p82 = scmp.ne.s32.totalorder %s70, %s71
      %p83 = scmp.eq.s32.totalorder %s26, 1
      %p84 = por %p82, %p83
      %p86 = scmp.ne.s32.totalorder %s71, %s85
      %p87 = scmp.eq.s32.totalorder %s26, 0
      %p88 = por %p86, %p87
      %s89 = ssub.s32 %s27, %s39
      %p90 = scmp.eq.s32.totalorder %s89, 0
      %s92 = sadd.s32 %s91, 1
      %s93 = scalar_select %p90, %s91, %s92
      %p96 = pneg %p90
      %p97 = scmp.eq.s32.totalorder %s20, 1
      %p98 = por %p96, %p97
      %p99 = scmp.ne.s32.totalorder %s91, %s94
      %p100 = scmp.eq.s32.totalorder %s20, 0
      %p101 = por %p99, %p100
      %p102 = scmp.ne.s32.totalorder %s91, %s94
      %p103 = scmp.eq.s32.totalorder %s25, 1
      %p104 = por %p102, %p103
      %p105 = scmp.ne.s32.totalorder %s94, %s95
      %p106 = scmp.eq.s32.totalorder %s25, 0
      %p107 = por %p105, %p106
      %p108 = scmp.ne.s32.totalorder %s94, %s95
      %p109 = scmp.eq.s32.totalorder %s26, 1
      %p110 = por %p108, %p109
      %p112 = scmp.ne.s32.totalorder %s95, %s111
      %p113 = scmp.eq.s32.totalorder %s26, 0
      %p114 = por %p112, %p113
      %s115 = ssub.s32 %s27, %s39
      %p116 = scmp.eq.s32.totalorder %s115, 0
      %s118 = sadd.s32 %s117, 1
      %s119 = scalar_select %p116, %s117, %s118
      %p122 = pneg %p116
      %p123 = scmp.eq.s32.totalorder %s20, 1
      %p124 = por %p122, %p123
      %p125 = scmp.ne.s32.totalorder %s117, %s120
      %p126 = scmp.eq.s32.totalorder %s20, 0
      %p127 = por %p125, %p126
      %p128 = scmp.ne.s32.totalorder %s117, %s120
      %p129 = scmp.eq.s32.totalorder %s25, 1
      %p130 = por %p128, %p129
      %p131 = scmp.ne.s32.totalorder %s120, %s121
      %p132 = scmp.eq.s32.totalorder %s25, 0
      %p133 = por %p131, %p132
      %p134 = scmp.ne.s32.totalorder %s120, %s121
      %p135 = scmp.eq.s32.totalorder %s26, 1
      %p136 = por %p134, %p135
      %p138 = scmp.ne.s32.totalorder %s121, %s137
      %p139 = scmp.eq.s32.totalorder %s26, 0
      %p140 = por %p138, %p139
      %p141 = scmp.le.s32.totalorder 1, %s20
      %p142 = scmp.lt.s32.totalorder %s20, 3
      %p143 = pnand %p141, %p142
      %p144 = pneg %p143
      // Predicated region
      $region9: #{tpu_custom_call.1} parent=5 // pred_check
        _
      $region10: #{tpu_custom_call.1} parent=5 // pred_check_branch
        %146 = sbr.rel (%p143) target = $region12
      $region11: #{tpu_custom_call.1} parent=5 // pred_region
        %s147 = ssub.s32 %s20, 1
        // Predicated region
        $region13: #{tpu_custom_call.1} parent=11 // pred_check
          %p148 = pneg %p81
        $region14: #{tpu_custom_call.1} parent=11 // pred_check_branch
          %150 = sbr.rel (%p148) target = $region16
        $region15: #{tpu_custom_call.1} parent=11 // pred_region
          %s152 = ssub.s32 1024, 1024
          %153 = vsyncadd [#allocation6], %s152
          %s154 = sshll.u32 [#allocation5], 4
          %s155 = int_to_ptr.vmem [resolvable:$true] %s154
          %160 = dma.hbm_to_vmem [thread:$0]  %s1, 1024, %s155, [#allocation6], 64, 64, 4
        $region16: #{tpu_custom_call.1} parent=11 // pred_fallthru
          _
      $region12: #{tpu_custom_call.1} parent=5 // pred_fallthru
        _
      %p161 = scmp.lt.s32.totalorder %s20, 2
      // Predicated region
      $region17: #{tpu_custom_call.1} parent=5 // pred_check
        %p162 = pneg %p161
      $region18: #{tpu_custom_call.1} parent=5 // pred_check_branch
        %164 = sbr.rel (%p162) target = $region20
      $region19: #{tpu_custom_call.1} parent=5 // pred_region
        // Predicated region
        $region21: #{tpu_custom_call.1} parent=19 // pred_check
          %p165 = pneg %p54
        $region22: #{tpu_custom_call.1} parent=19 // pred_check_branch
          %167 = sbr.rel (%p165) target = $region24
        $region23: #{tpu_custom_call.1} parent=19 // pred_region
          %s168 = sand.u32 %s44, 1
          %s169 = scalar_lea.sflag [#allocation3], %s168
          %s170 = sand.u32 %s44, 1
          %s171 = smul.addr %s170, 8
          %s172 = scalar_lea.vmem [#allocation2], %s171
          %s173 = sadd.s32 %s27, %s28
          %s174 = smul.u32 2, %s173
          %s176 = ssub.s32 128, 128
          %177 = vsyncadd %s169, %s176
          %s178 = smul.addr %s174, 64
          %s179 = scalar_lea.hbm %s0, %s178
          %s180 = sshll.u32 %s172, 4
          %s181 = int_to_ptr.vmem [resolvable:$true] %s180
          %186 = dma.hbm_to_vmem [thread:$0]  %s179, 128, %s181, %s169, 64, 64, 4
        $region24: #{tpu_custom_call.1} parent=19 // pred_fallthru
          _
      $region20: #{tpu_custom_call.1} parent=5 // pred_fallthru
        _
      %p187 = scmp.le.s32.totalorder 1, %s20
      %p188 = scmp.lt.s32.totalorder %s20, 3
      %p189 = pnand %p187, %p188
      %p190 = pneg %p189
      // Predicated region
      $region25: #{tpu_custom_call.1} parent=5 // pred_check
        _
      $region26: #{tpu_custom_call.1} parent=5 // pred_check_branch
        %192 = sbr.rel (%p189) target = $region28
      $region27: #{tpu_custom_call.1} parent=5 // pred_region
        %s193 = ssub.s32 %s20, 1
        %s194 = sand.u32 %s47, 1
        %s195 = scalar_lea.sflag [#allocation3], %s194
        %s196 = sand.u32 %s47, 1
        %s197 = smul.addr %s196, 8
        %s198 = scalar_lea.vmem [#allocation2], %s197
        // Predicated region
        $region29: #{tpu_custom_call.1} parent=27 // pred_check
          %p199 = pneg %p60
        $region30: #{tpu_custom_call.1} parent=27 // pred_check_branch
          %201 = sbr.rel (%p199) target = $region32
        $region31: #{tpu_custom_call.1} parent=27 // pred_region
          %202 = dma.done %s195, 128
        $region32: #{tpu_custom_call.1} parent=27 // pred_fallthru
          _
        // Predicated region
        $region33: #{tpu_custom_call.1} parent=27 // pred_check
          %p203 = pneg %p81
        $region34: #{tpu_custom_call.1} parent=27 // pred_check_branch
          %205 = sbr.rel (%p203) target = $region36
        $region35: #{tpu_custom_call.1} parent=27 // pred_region
          %206 = dma.done [#allocation6], 1024
        $region36: #{tpu_custom_call.1} parent=27 // pred_fallthru
          _
        %s207 = sand.u32 %s47, 1
        %s208 = scalar_lea.sflag [#allocation3], %s207
        %s209 = sand.u32 %s47, 1
        %s210 = smul.addr %s209, 8
        %s211 = scalar_lea.vmem [#allocation2], %s210
        %p212 = pneg %p60
        %p213 = pneg %p57
        %p214 = pneg %p81
        %p215 = pneg %p78
        %p216 = pneg %p107
        %p217 = pneg %p104
        %s218 = sand.u32 %s94, 1
        %s219 = scalar_lea.sflag [#allocation4], %s218
        %s220 = sand.u32 %s94, 1
        %s221 = scalar_lea.vmem [#allocation7], %s220
        %p222 = pneg %p133
        %p223 = pneg %p130
        %s224 = sand.u32 %s120, 1
        %s225 = scalar_lea.sflag [#allocation9], %s224
        %s226 = sand.u32 %s120, 1
        %s227 = scalar_lea.vmem [#allocation8], %s226
        %s228 = sadd.s32 %s29, %s30
        %s229 = smul.u32 2, %s228
        %p231 = scmp.eq.s32.totalorder %s30, 0
        // Predicated region
        $region37: #{tpu_custom_call.1} parent=27 // pred_check
          %p232 = pneg %p231
        $region38: #{tpu_custom_call.1} parent=27 // pred_check_branch
          %234 = sbr.rel (%p232) target = $region40
        $region39: #{tpu_custom_call.1} parent=27 // pred_region
          %235 = vst [vmem:[%s221] sm:$0x1] 0.0
          %236 = vst [vmem:[%s227] sm:$0x1] 0.0
        $region40: #{tpu_custom_call.1} parent=27 // pred_fallthru
          _
        %v237 = vld [vmem:[%s198] sm:$0xf]
        %v238 = vld [vmem:[%s198 + $0x4] sm:$0xf]
        %v239 = vld [vmem:[#allocation5] sm:$0xf]
        %v240 = vld [vmem:[#allocation5 + $0x4] sm:$0xf]
        %v241 = vld [vmem:[#allocation5 + $0x8] sm:$0xf]
        %v242 = vld [vmem:[#allocation5 + $0xc] sm:$0xf]
        %v243 = vld [vmem:[#allocation5 + $0x10] sm:$0xf]
        %v244 = vld [vmem:[#allocation5 + $0x14] sm:$0xf]
        %v245 = vld [vmem:[#allocation5 + $0x18] sm:$0xf]
        %v246 = vld [vmem:[#allocation5 + $0x1c] sm:$0xf]
        %v247 = vld [vmem:[#allocation5 + $0x20] sm:$0xf]
        %v248 = vld [vmem:[#allocation5 + $0x24] sm:$0xf]
        %v249 = vld [vmem:[#allocation5 + $0x28] sm:$0xf]
        %v250 = vld [vmem:[#allocation5 + $0x2c] sm:$0xf]
        %v251 = vld [vmem:[#allocation5 + $0x30] sm:$0xf]
        %v252 = vld [vmem:[#allocation5 + $0x34] sm:$0xf]
        %v253 = vld [vmem:[#allocation5 + $0x38] sm:$0xf]
        %v254 = vld [vmem:[#allocation5 + $0x3c] sm:$0xf]
        %v257 = vunpack.c.l.b16 %v237
        %v258 = vunpack.c.l.b16 %v238
        %v259 = vpack.c.b16 %v258, %v257
        %v277 = vunpack.c.l.b16 %v239
        %v278 = vunpack.c.l.b16 %v240
        %v279 = vunpack.c.l.b16 %v241
        %v280 = vunpack.c.l.b16 %v242
        %v281 = vunpack.c.l.b16 %v243
        %v282 = vunpack.c.l.b16 %v244
        %v283 = vunpack.c.l.b16 %v245
        %v284 = vunpack.c.l.b16 %v246
        %v285 = vunpack.c.l.b16 %v247
        %v286 = vunpack.c.l.b16 %v248
        %v287 = vunpack.c.l.b16 %v249
        %v288 = vunpack.c.l.b16 %v250
        %v289 = vunpack.c.l.b16 %v251
        %v290 = vunpack.c.l.b16 %v252
        %v291 = vunpack.c.l.b16 %v253
        %v292 = vunpack.c.l.b16 %v254
        %v293 = vpack.c.b16 %v278, %v277
        %v294 = vpack.c.b16 %v280, %v279
        %v295 = vpack.c.b16 %v282, %v281
        %v296 = vpack.c.b16 %v284, %v283
        %v297 = vpack.c.b16 %v286, %v285
        %v298 = vpack.c.b16 %v288, %v287
        %v299 = vpack.c.b16 %v290, %v289
        %v300 = vpack.c.b16 %v292, %v291
        %309 = vmatprep.subr.bf16.mxu0 0
        %310 = vmatpush1.bf16.msra.mxu0 %v300
        %311 = vmatprep.subr.bf16.mxu0 0
        %312 = vmatpush1.bf16.msra.mxu0 %v299
        %313 = vmatprep.subr.bf16.mxu0 0
        %314 = vmatpush1.bf16.msra.mxu0 %v298
        %315 = vmatprep.subr.bf16.mxu0 0
        %316 = vmatpush1.bf16.msra.mxu0 %v297
        %317 = vmatprep.subr.bf16.mxu0 0
        %318 = vmatpush1.bf16.msra.mxu0 %v296
        %319 = vmatprep.subr.bf16.mxu0 0
        %320 = vmatpush1.bf16.msra.mxu0 %v295
        %321 = vmatprep.subr.bf16.mxu0 0
        %322 = vmatpush1.bf16.msra.mxu0 %v294
        %323 = vmatprep.subr.bf16.mxu0 0
        %324 = vmatpush1.bf16.msra.mxu0 %v293
        %325 = vmatprep.subr.bf16.mxu0 0
        %326 = vmatpush2.bf16.msra.mxu0 0
        %327 = vmatprep.subr.bf16.mxu0 0
        %328 = vmatpush2.bf16.msra.mxu0 0
        %329 = vmatprep.subr.bf16.mxu0 0
        %330 = vmatpush2.bf16.msra.mxu0 0
        %331 = vmatprep.subr.bf16.mxu0 0
        %332 = vmatpush2.bf16.msra.mxu0 0
        %333 = vmatprep.subr.bf16.mxu0 0
        %334 = vmatpush2.bf16.msra.mxu0 0
        %335 = vmatprep.subr.bf16.mxu0 0
        %336 = vmatpush2.bf16.msra.mxu0 0
        %337 = vmatprep.subr.bf16.mxu0 0
        %338 = vmatpush2.bf16.msra.mxu0 0
        %339 = vmatprep.subr.bf16.mxu0 0
        %340 = vmatpush2.bf16.msra.mxu0 0
        %341 = vmatprep.mubr.bf16.mxu0 0
        %342 = vmatmul.mubr.bf16.gmra.mxu0 %v259
        %v343 = vpop.f32.mrf.mxu0
        %v344 = vadd.f32 0.0, %v343
        %v345 = vpop.f32.mrf.mxu0
        %v346 = vpop.f32.mrf.mxu0
        %v347 = vadd.f32 0.0, %v346
        %v348 = vpop.f32.mrf.mxu0
        %349 = vdwg.mxu0
        %v350 = vmax.f32 %v344, 0.0
        %v351 = vmax.f32 %v347, 0.0
        %v352 = vld [vmem:[%s221] sm:$0x1]
        %v353 = vadd.f32 %v350, %v351
        %v354 = vrot.slane %v353, 4
        %v355 = vadd.f32 %v353, %v354
        %v356 = vrot.slane %v355, 2
        %v357 = vadd.f32 %v355, %v356
        %v358 = vrot.slane %v357, 1
        %v359 = vadd.f32 %v357, %v358
        %v360 = vadd.f32 %v352, %v359
        %361 = vst [vmem:[%s221] sm:$0x1] %v360
        %v362 = vld [vmem:[%s227] sm:$0x1]
        %v363 = vmul.f32 %v350, %v350
        %v364 = vmul.f32 %v351, %v351
        %v365 = vadd.f32 %v363, %v364
        %v366 = vrot.slane %v365, 4
        %v367 = vadd.f32 %v365, %v366
        %v368 = vrot.slane %v367, 2
        %v369 = vadd.f32 %v367, %v368
        %v370 = vrot.slane %v369, 1
        %v371 = vadd.f32 %v369, %v370
        %v372 = vadd.f32 %v362, %v371
        %373 = vst [vmem:[%s227] sm:$0x1] %v372
        %s374 = sand.u32 %s94, 1
        %s375 = scalar_lea.sflag [#allocation4], %s374
        %s376 = sand.u32 %s94, 1
        %s377 = scalar_lea.vmem [#allocation7], %s376
        %s378 = sand.u32 %s120, 1
        %s379 = scalar_lea.sflag [#allocation9], %s378
        %s380 = sand.u32 %s120, 1
        %s381 = scalar_lea.vmem [#allocation8], %s380
        // Predicated region
        $region41: #{tpu_custom_call.1} parent=27 // pred_check
          %p382 = pneg %p104
        $region42: #{tpu_custom_call.1} parent=27 // pred_check_branch
          %384 = sbr.rel (%p382) target = $region44
        $region43: #{tpu_custom_call.1} parent=27 // pred_region
          %s386 = ssub.s32 16, 16
          %387 = vsyncadd %s375, %s386
          %s388 = smul.addr %s29, 16
          %s389 = scalar_lea.hbm %s2, %s388
          %s391 = sshll.u32 %s377, 4
          %s392 = int_to_ptr.vmem [resolvable:$true] %s391
          %394 = dma.vmem_to_hbm [thread:$0]  %s392, 16, %s389, %s375
        $region44: #{tpu_custom_call.1} parent=27 // pred_fallthru
          _
        // Predicated region
        $region45: #{tpu_custom_call.1} parent=27 // pred_check
          %p395 = pneg %p130
        $region46: #{tpu_custom_call.1} parent=27 // pred_check_branch
          %397 = sbr.rel (%p395) target = $region48
        $region47: #{tpu_custom_call.1} parent=27 // pred_region
          %s399 = ssub.s32 16, 16
          %400 = vsyncadd %s379, %s399
          %s401 = smul.addr %s29, 16
          %s402 = scalar_lea.hbm %s3, %s401
          %s404 = sshll.u32 %s381, 4
          %s405 = int_to_ptr.vmem [resolvable:$true] %s404
          %407 = dma.vmem_to_hbm [thread:$0]  %s405, 16, %s402, %s379
        $region48: #{tpu_custom_call.1} parent=27 // pred_fallthru
          _
      $region28: #{tpu_custom_call.1} parent=5 // pred_fallthru
        _
      %p408 = scmp.le.s32.totalorder 2, %s20
      // Predicated region
      $region49: #{tpu_custom_call.1} parent=5 // pred_check
        %p409 = pneg %p408
      $region50: #{tpu_custom_call.1} parent=5 // pred_check_branch
        %411 = sbr.rel (%p409) target = $region52
      $region51: #{tpu_custom_call.1} parent=5 // pred_region
        %s412 = ssub.s32 %s20, 2
        // Predicated region
        $region53: #{tpu_custom_call.1} parent=51 // pred_check
          %p413 = pneg %p110
        $region54: #{tpu_custom_call.1} parent=51 // pred_check_branch
          %415 = sbr.rel (%p413) target = $region56
        $region55: #{tpu_custom_call.1} parent=51 // pred_region
          %s416 = sand.u32 %s95, 1
          %s417 = scalar_lea.sflag [#allocation4], %s416
          %s418 = sand.u32 %s95, 1
          %s419 = scalar_lea.vmem [#allocation7], %s418
          %420 = dma.done %s417, 16
        $region56: #{tpu_custom_call.1} parent=51 // pred_fallthru
          _
        // Predicated region
        $region57: #{tpu_custom_call.1} parent=51 // pred_check
          %p421 = pneg %p136
        $region58: #{tpu_custom_call.1} parent=51 // pred_check_branch
          %423 = sbr.rel (%p421) target = $region60
        $region59: #{tpu_custom_call.1} parent=51 // pred_region
          %s424 = sand.u32 %s121, 1
          %s425 = scalar_lea.sflag [#allocation9], %s424
          %s426 = sand.u32 %s121, 1
          %s427 = scalar_lea.vmem [#allocation8], %s426
          %428 = dma.done %s425, 16
        $region60: #{tpu_custom_call.1} parent=51 // pred_fallthru
          _
      $region52: #{tpu_custom_call.1} parent=5 // pred_fallthru
        _
    $region6: #{tpu_custom_call.1} parent=1 // loop_footer
      %s24 = sadd.s32 1, %s20
    $region7: #{tpu_custom_call.1} parent=1 // loop_footer_branch
      %19 = sbr.rel target = $region3
    $region8: #{tpu_custom_call.1} parent=1 // loop_exit
      _
    %429 = vsyncpa [#allocation3], 1
    %s430 = scalar_lea.sflag [#allocation3], 1
    %431 = vsyncpa %s430, 1
    %432 = vsyncpa [#allocation6], 1
    %433 = vsyncpa [#allocation4], 1
    %s434 = scalar_lea.sflag [#allocation4], 1
    %435 = vsyncpa %s434, 1
    %436 = vsyncpa [#allocation9], 1
    %s437 = scalar_lea.sflag [#allocation9], 1
    %438 = vsyncpa %s437, 1

</llo_original>
